<compile_context>
chip_gen: v5e
topology: v5e:2x2
jax: 0.10.0
libtpu: 0.0.40
codegen_flags: <defaults>
</compile_context>

<pallas_src>
import functools

import jax
import jax.numpy as jnp
from jax.experimental import pallas as pl
from jax.experimental.pallas import tpu as pltpu


def _round_up(x, m):
    return ((x + m - 1) // m) * m


def _store_loss(loss_col, loss_ref):
    """loss_col: (tm, 1) f32 per-row losses.

    Lane-dense (1, tm) output blocks give ~4 B/row of HBM writeback instead of
    the 512 B/row of a lane-padded (tm, 1) column; the sublane->lane relayout
    of the reduction result goes to the XLU, which has slack here.
    """
    tm = loss_col.shape[0]
    if loss_ref.shape == (1, tm):
        loss_ref[...] = loss_col.reshape(1, tm).astype(loss_ref.dtype)
    else:
        loss_ref[...] = loss_col.astype(loss_ref.dtype)


def _ce_soft_label_kernel(logits_ref, tgt_ref, loss_ref, *, normalized_targets):
    """Single-sweep fused loss over a (tm, C) row block."""
    x = logits_ref[...].astype(jnp.float32)
    t = tgt_ref[...].astype(jnp.float32)
    m = jnp.max(x, axis=1, keepdims=True)                               # (tm, 1)
    lse = m + jnp.log(jnp.sum(jnp.exp(x - m), axis=1, keepdims=True))   # (tm, 1)
    s_xt = jnp.sum(x * t, axis=1, keepdims=True)                        # (tm, 1)
    if normalized_targets:
        loss = lse - s_xt
    else:
        loss = lse * jnp.sum(t, axis=1, keepdims=True) - s_xt
    _store_loss(loss, loss_ref)


def _ce_soft_label_blocked_kernel(logits_ref, tgt_ref, loss_ref,
                                  m_acc, l_acc, sxt_acc, st_acc,
                                  *, num_class, tc, normalized_targets):
    """Class-blocked online-logsumexp path for vocab-scale C."""
    k = pl.program_id(1)

    @pl.when(k == 0)
    def _init():
        m_acc[...] = jnp.full_like(m_acc, -jnp.inf)
        l_acc[...] = jnp.zeros_like(l_acc)
        sxt_acc[...] = jnp.zeros_like(sxt_acc)
        st_acc[...] = jnp.zeros_like(st_acc)

    x = logits_ref[...].astype(jnp.float32)     # (tm, tc)
    t = tgt_ref[...].astype(jnp.float32)

    # Mask the lane-padded tail of the last class block: -inf on the max/exp
    # path, 0 on the sums, so out-of-range classes cannot contribute.
    col = jax.lax.broadcasted_iota(jnp.int32, x.shape, 1)
    valid = col < (num_class - k * tc)
    x_m = jnp.where(valid, x, -jnp.inf)

    m_prev = m_acc[...]
    m_new = jnp.maximum(m_prev, jnp.max(x_m, axis=1, keepdims=True))
    alpha = jnp.exp(m_prev - m_new)
    l_acc[...] = alpha * l_acc[...] + jnp.sum(jnp.exp(x_m - m_new), axis=1,
                                              keepdims=True)
    sxt_acc[...] += jnp.sum(jnp.where(valid, x * t, 0.0), axis=1, keepdims=True)
    if not normalized_targets:
        st_acc[...] += jnp.sum(jnp.where(valid, t, 0.0), axis=1, keepdims=True)
    m_acc[...] = m_new

    @pl.when(k == pl.num_programs(1) - 1)
    def _finalize():
        lse = m_acc[...] + jnp.log(l_acc[...])
        if normalized_targets:
            loss = lse - sxt_acc[...]
        else:
            loss = lse * st_acc[...] - sxt_acc[...]
        _store_loss(loss, loss_ref)


def _pick_row_tile(n, block_classes, dtypes, vmem_budget_bytes, tm_cap,
                   acc_bytes_per_row=0):
    """Row tile from a VMEM budget that counts the double-buffered DMA blocks,
    the in-register f32 upcast temporaries and any per-row accumulators."""
    lanes = _round_up(max(block_classes, 1), 128)
    bytes_per_row = 2 * 4 + acc_bytes_per_row          # output block (+ accums)
    bytes_per_row += 4 * lanes * 4                     # x, t, exp, x*t f32 temps
    for d in dtypes:
        bytes_per_row += 2 * lanes * jnp.dtype(d).itemsize   # double-buffered DMA
    tm = max(128, vmem_budget_bytes // bytes_per_row)
    tm = min(tm, tm_cap)
    if n <= tm:
        return n            # single full-array block: no padding, no partial block
    tm = max(128, (tm // 128) * 128)
    # Balance the "parallel" row axis across v7x's two TensorCores: prefer an
    # even step count (>= 4), but never shrink the tile below ~1024 rows.
    steps = pl.cdiv(n, tm)
    if steps % 2 == 1:
        tm_even = _round_up(pl.cdiv(n, steps + 1), 128)
        if tm_even >= 1024:
            tm = tm_even
    elif steps < 4:
        tm_more = _round_up(pl.cdiv(n, 4), 128)
        if tm_more >= 1024:
            tm = tm_more
    return tm


def _call_fused(outputs, targets, n, c, tm, lane_dense, normalized_targets,
                vmem_limit_bytes, cost):
    num_blocks = pl.cdiv(n, tm)
    out_len = num_blocks * tm
    if lane_dense:
        out_shape = jax.ShapeDtypeStruct((num_blocks, tm), jnp.float32)
        out_spec = pl.BlockSpec((1, tm), lambda i: (i, 0))
    else:
        out_shape = jax.ShapeDtypeStruct((out_len, 1), jnp.float32)
        out_spec = pl.BlockSpec((tm, 1), lambda i: (i, 0))
    kernel = functools.partial(_ce_soft_label_kernel,
                               normalized_targets=normalized_targets)
    out = pl.pallas_call(
        kernel,
        out_shape=out_shape,
        grid_spec=pltpu.PrefetchScalarGridSpec(
            num_scalar_prefetch=0,
            grid=(num_blocks,),
            in_specs=[pl.BlockSpec((tm, c), lambda i: (i, 0)),
                      pl.BlockSpec((tm, c), lambda i: (i, 0))],
            out_specs=out_spec,
        ),
        compiler_params=pltpu.CompilerParams(
            dimension_semantics=("parallel",),
            vmem_limit_bytes=vmem_limit_bytes,
        ),
        cost_estimate=cost,
    )(outputs, targets)
    return out.reshape(-1)[:n]


def _call_blocked(outputs, targets, n, c, tm, tc, lane_dense, normalized_targets,
                  vmem_limit_bytes, cost):
    num_blocks = pl.cdiv(n, tm)
    num_cblocks = pl.cdiv(c, tc)
    out_len = num_blocks * tm
    if lane_dense:
        out_shape = jax.ShapeDtypeStruct((num_blocks, tm), jnp.float32)
        out_spec = pl.BlockSpec((1, tm), lambda i, k: (i, 0))
    else:
        out_shape = jax.ShapeDtypeStruct((out_len, 1), jnp.float32)
        out_spec = pl.BlockSpec((tm, 1), lambda i, k: (i, 0))
    kernel = functools.partial(_ce_soft_label_blocked_kernel,
                               num_class=c, tc=tc,
                               normalized_targets=normalized_targets)
    out = pl.pallas_call(
        kernel,
        out_shape=out_shape,
        grid_spec=pltpu.PrefetchScalarGridSpec(
            num_scalar_prefetch=0,
            grid=(num_blocks, num_cblocks),
            in_specs=[pl.BlockSpec((tm, tc), lambda i, k: (i, k)),
                      pl.BlockSpec((tm, tc), lambda i, k: (i, k))],
            out_specs=out_spec,
            scratch_shapes=[pltpu.VMEM((tm, 1), jnp.float32)] * 4,
        ),
        compiler_params=pltpu.CompilerParams(
            dimension_semantics=("parallel", "arbitrary"),
            vmem_limit_bytes=vmem_limit_bytes,
        ),
        cost_estimate=cost,
    )(outputs, targets)
    return out.reshape(-1)[:n]


_LANE_DENSE_OK = [True]   # flips to False if this Mosaic build rejects the relayout


def ce_soft_label_forward(outputs, targets, *, tm=None, tc=None,
                          normalized_targets=False,
                          vmem_budget_bytes=None, vmem_limit_bytes=None,
                          tm_cap=8192, blocked_class_threshold=8192):
    """Pallas implementation of CE_Soft_Label.forward. Returns loss_vec (N,)."""
    n, c = outputs.shape
    assert targets.shape == (n, c)

    if vmem_budget_bytes is None or vmem_limit_bytes is None:
        try:
            cap = int(getattr(pltpu.get_tpu_info(), "vmem_capacity_bytes",
                              64 * 1024 * 1024))
        except Exception:
            cap = 64 * 1024 * 1024                     # v7x-conservative default
        if vmem_budget_bytes is None:
            vmem_budget_bytes = min(cap // 2, 48 * 1024 * 1024)
        if vmem_limit_bytes is None:
            vmem_limit_bytes = min(cap * 3 // 4, 100 * 1024 * 1024)

    # Class-axis blocking only for vocab-scale C (or when forced via tc).
    use_blocked = ((tc is not None and tc < c)
                   or (tc is None and c > blocked_class_threshold))
    if use_blocked:
        tc = _round_up(min(tc or 2048, c), 128)
        use_blocked = tc < c

    dtypes = (outputs.dtype, targets.dtype)
    if tm is None:
        acc_bytes = 4 * 128 * 4 if use_blocked else 0
        tm = _pick_row_tile(n, tc if use_blocked else c, dtypes,
                            vmem_budget_bytes, tm_cap, acc_bytes)
    else:
        tm = min(tm, n)
        if tm != n:   # keep the sublane packing of the narrowest input dtype
            sub = max(8 * max(1, 4 // jnp.dtype(d).itemsize) for d in dtypes)
            tm = max(sub, (tm // sub) * sub)

    cost = pl.CostEstimate(
        flops=6 * n * c,
        transcendentals=n * c + n,
        bytes_accessed=n * c * (jnp.dtype(outputs.dtype).itemsize
                                + jnp.dtype(targets.dtype).itemsize) + n * 4,
    )

    def run(lane_dense):
        if use_blocked:
            return _call_blocked(outputs, targets, n, c, tm, tc, lane_dense,
                                 normalized_targets, vmem_limit_bytes, cost)
        return _call_fused(outputs, targets, n, c, tm, lane_dense,
                           normalized_targets, vmem_limit_bytes, cost)

    if _LANE_DENSE_OK[0]:
        try:
            return run(lane_dense=True)
        except Exception:
            # Lane-dense store needs a sublane->lane relayout; fall back to the
            # always-supported (tm, 1) output block if Mosaic rejects it.
            _LANE_DENSE_OK[0] = False
    return run(lane_dense=False)


if __name__ == "__main__":
    num_class = 100
    batch = 16

    key = jax.random.PRNGKey(0)
    k_logits, k_labels = jax.random.split(key)

    def ref_loss(o, t):
        return -jnp.sum(
            jax.nn.log_softmax(o.astype(jnp.float32), axis=1) * t, axis=1)

    # Deterministic synthetic inputs: logits + soft-label targets
    # (soft labels built like init_confidence: one-hot of noisy labels).
    outputs = jax.random.normal(k_logits, (batch, num_class), dtype=jnp.float32)
    noisy_labels = jax.random.randint(k_labels, (batch,), 0, num_class)
    targets = jax.nn.one_hot(noisy_labels, num_class, dtype=jnp.float32)

    loss_vec = jax.block_until_ready(ce_soft_label_forward(outputs, targets))
    assert loss_vec.shape == (batch,)
    assert jnp.allclose(loss_vec, ref_loss(outputs, targets), atol=1e-5, rtol=1e-5)

    # Normalized-targets fast path (sum(t) == 1 -> one fewer cross-lane reduction).
    loss_fast = jax.block_until_ready(
        ce_soft_label_forward(outputs, targets, normalized_targets=True))
    assert jnp.allclose(loss_fast, ref_loss(outputs, targets), atol=1e-5, rtol=1e-5)

    # Ragged batch (no padding copies) + bf16 logits DMA'd in native dtype.
    batch2 = 37
    out2 = jax.random.normal(k_logits, (batch2, num_class), dtype=jnp.bfloat16)
    tgt2 = jax.nn.one_hot(
        jax.random.randint(k_labels, (batch2,), 0, num_class),
        num_class, dtype=jnp.float32)
    loss2 = jax.block_until_ready(ce_soft_label_forward(out2, tgt2))
    assert loss2.shape == (batch2,)
    assert jnp.allclose(loss2, ref_loss(out2, tgt2), atol=1e-3, rtol=1e-3)

    # Class-blocked online-logsumexp path (vocab-scale-C variant), forced via tc;
    # exercises the masked partial class block (300 = 2*128 + 44).
    batch3, c3 = 24, 300
    out3 = jax.random.normal(k_logits, (batch3, c3), dtype=jnp.float32)
    tgt3 = jax.nn.softmax(jax.random.normal(k_labels, (batch3, c3)), axis=1)
    loss3 = jax.block_until_ready(ce_soft_label_forward(out3, tgt3, tc=128))
    assert loss3.shape == (batch3,)
    assert jnp.allclose(loss3, ref_loss(out3, tgt3), atol=1e-4, rtol=1e-5)

    print("KERNEL_OK")
</pallas_src>

<mosaic_0001>
module attributes {stable_mosaic.version = 11 : i64} {
  func.func @_ce_soft_label_kernel(%arg0: i32, %arg1: memref<16x100xf32, #tpu.memory_space<vmem>>, %arg2: memref<16x100xf32, #tpu.memory_space<vmem>>, %arg3: memref<1x16xf32, #tpu.memory_space<vmem>>) attributes {dimension_semantics = [#tpu.dimension_semantics<parallel>], iteration_bounds = array<i64: 1>, scalar_prefetch = 0 : i64, scratch_operands = 0 : i64, tpu.core_type = #tpu.core_type<tc>, window_params = [{transform_indices = @transform_0, window_bounds = array<i64: 16, 100>}, {transform_indices = @transform_1, window_bounds = array<i64: 16, 100>}, {transform_indices = @transform_2, window_bounds = array<i64: 1, 16>}]} {
    %c0 = arith.constant 0 : index
    %c0_0 = arith.constant 0 : index
    %0 = vector.load %arg1[%c0, %c0_0] : memref<16x100xf32, #tpu.memory_space<vmem>>, vector<16x100xf32>
    %c0_1 = arith.constant 0 : index
    %c0_2 = arith.constant 0 : index
    %1 = vector.load %arg2[%c0_1, %c0_2] : memref<16x100xf32, #tpu.memory_space<vmem>>, vector<16x100xf32>
    %cst = arith.constant dense<0xFF800000> : vector<16xf32>
    %2 = vector.multi_reduction <maximumf>, %0, %cst [1] : vector<16x100xf32> to vector<16xf32>
    %3 = vector.shape_cast %2 : vector<16xf32> to vector<16x1xf32>
    %4 = vector.broadcast %3 : vector<16x1xf32> to vector<16x100xf32>
    %5 = arith.subf %0, %4 : vector<16x100xf32>
    %6 = math.exp %5 : vector<16x100xf32>
    %cst_3 = arith.constant dense<0.000000e+00> : vector<16xf32>
    %7 = vector.multi_reduction <add>, %6, %cst_3 [1] : vector<16x100xf32> to vector<16xf32>
    %8 = vector.shape_cast %7 : vector<16xf32> to vector<16x1xf32>
    %9 = math.log %8 : vector<16x1xf32>
    %10 = arith.addf %3, %9 : vector<16x1xf32>
    %11 = arith.mulf %0, %1 : vector<16x100xf32>
    %cst_4 = arith.constant dense<0.000000e+00> : vector<16xf32>
    %12 = vector.multi_reduction <add>, %11, %cst_4 [1] : vector<16x100xf32> to vector<16xf32>
    %13 = vector.shape_cast %12 : vector<16xf32> to vector<16x1xf32>
    %cst_5 = arith.constant dense<0.000000e+00> : vector<16xf32>
    %14 = vector.multi_reduction <add>, %1, %cst_5 [1] : vector<16x100xf32> to vector<16xf32>
    %15 = vector.shape_cast %14 : vector<16xf32> to vector<16x1xf32>
    %16 = arith.mulf %10, %15 : vector<16x1xf32>
    %17 = arith.subf %16, %13 : vector<16x1xf32>
    %18 = vector.shape_cast %17 : vector<16x1xf32> to vector<1x16xf32>
    %c0_6 = arith.constant 0 : index
    %c0_7 = arith.constant 0 : index
    %19 = vector.load %arg3[%c0_6, %c0_7] : memref<1x16xf32, #tpu.memory_space<vmem>>, vector<1x16xf32>
    tpu.vector_store %arg3[%c0_6, %c0_7], %18 {strides = array<i32>} : memref<1x16xf32, #tpu.memory_space<vmem>>, vector<1x16xf32>,
    return
  }
  func.func @transform_0(%arg0: i32) -> (i32, i32) {
    %c0_i32 = arith.constant 0 : i32
    %c0_i32_0 = arith.constant 0 : i32
    return %arg0, %c0_i32 : i32, i32
  }
  func.func @transform_1(%arg0: i32) -> (i32, i32) {
    %c0_i32 = arith.constant 0 : i32
    %c0_i32_0 = arith.constant 0 : i32
    return %arg0, %c0_i32 : i32, i32
  }
  func.func @transform_2(%arg0: i32) -> (i32, i32) {
    %c0_i32 = arith.constant 0 : i32
    %c0_i32_0 = arith.constant 0 : i32
    return %arg0, %c0_i32 : i32, i32
  }
}

module attributes {stable_mosaic.version = 11 : i64} {
  func.func @_ce_soft_label_kernel(%arg0: i32, %arg1: memref<16x100xf32, #tpu.memory_space<vmem>>, %arg2: memref<16x100xf32, #tpu.memory_space<vmem>>, %arg3: memref<16x1xf32, #tpu.memory_space<vmem>>) attributes {dimension_semantics = [#tpu.dimension_semantics<parallel>], iteration_bounds = array<i64: 1>, scalar_prefetch = 0 : i64, scratch_operands = 0 : i64, tpu.core_type = #tpu.core_type<tc>, window_params = [{transform_indices = @transform_0, window_bounds = array<i64: 16, 100>}, {transform_indices = @transform_1, window_bounds = array<i64: 16, 100>}, {transform_indices = @transform_2, window_bounds = array<i64: 16, 1>}]} {
    %c0 = arith.constant 0 : index
    %c0_0 = arith.constant 0 : index
    %0 = vector.load %arg1[%c0, %c0_0] : memref<16x100xf32, #tpu.memory_space<vmem>>, vector<16x100xf32>
    %c0_1 = arith.constant 0 : index
    %c0_2 = arith.constant 0 : index
    %1 = vector.load %arg2[%c0_1, %c0_2] : memref<16x100xf32, #tpu.memory_space<vmem>>, vector<16x100xf32>
    %cst = arith.constant dense<0xFF800000> : vector<16xf32>
    %2 = vector.multi_reduction <maximumf>, %0, %cst [1] : vector<16x100xf32> to vector<16xf32>
    %3 = vector.shape_cast %2 : vector<16xf32> to vector<16x1xf32>
    %4 = vector.broadcast %3 : vector<16x1xf32> to vector<16x100xf32>
    %5 = arith.subf %0, %4 : vector<16x100xf32>
    %6 = math.exp %5 : vector<16x100xf32>
    %cst_3 = arith.constant dense<0.000000e+00> : vector<16xf32>
    %7 = vector.multi_reduction <add>, %6, %cst_3 [1] : vector<16x100xf32> to vector<16xf32>
    %8 = vector.shape_cast %7 : vector<16xf32> to vector<16x1xf32>
    %9 = math.log %8 : vector<16x1xf32>
    %10 = arith.addf %3, %9 : vector<16x1xf32>
    %11 = arith.mulf %0, %1 : vector<16x100xf32>
    %cst_4 = arith.constant dense<0.000000e+00> : vector<16xf32>
    %12 = vector.multi_reduction <add>, %11, %cst_4 [1] : vector<16x100xf32> to vector<16xf32>
    %13 = vector.shape_cast %12 : vector<16xf32> to vector<16x1xf32>
    %cst_5 = arith.constant dense<0.000000e+00> : vector<16xf32>
    %14 = vector.multi_reduction <add>, %1, %cst_5 [1] : vector<16x100xf32> to vector<16xf32>
    %15 = vector.shape_cast %14 : vector<16xf32> to vector<16x1xf32>
    %16 = arith.mulf %10, %15 : vector<16x1xf32>
    %17 = arith.subf %16, %13 : vector<16x1xf32>
    %c0_6 = arith.constant 0 : index
    %c0_7 = arith.constant 0 : index
    %18 = vector.load %arg3[%c0_6, %c0_7] : memref<16x1xf32, #tpu.memory_space<vmem>>, vector<16x1xf32>
    tpu.vector_store %arg3[%c0_6, %c0_7], %17 {strides = array<i32>} : memref<16x1xf32, #tpu.memory_space<vmem>>, vector<16x1xf32>,
    return
  }
  func.func @transform_0(%arg0: i32) -> (i32, i32) {
    %c0_i32 = arith.constant 0 : i32
    %c0_i32_0 = arith.constant 0 : i32
    return %arg0, %c0_i32 : i32, i32
  }
  func.func @transform_1(%arg0: i32) -> (i32, i32) {
    %c0_i32 = arith.constant 0 : i32
    %c0_i32_0 = arith.constant 0 : i32
    return %arg0, %c0_i32 : i32, i32
  }
  func.func @transform_2(%arg0: i32) -> (i32, i32) {
    %c0_i32 = arith.constant 0 : i32
    %c0_i32_0 = arith.constant 0 : i32
    return %arg0, %c0_i32 : i32, i32
  }
}

</mosaic_0001>

<llo_original>
// kernel: tpu_custom_call.1
$region0: #{tpu_custom_call.1}
  #allocation0 [shape = 'u32[]', space=smem, size = 0x4, offset = 0x4, fixed_abs, tag = 'smem constant byte address 0x4 - core index']
  #allocation1 [shape = 'u32[72,128]{1,0:T(1,128)}', space=vmem, size = 0x9000, scoped, tag = 'internal scratch']
  %s0 = inlined_call_operand.hbm [shape: f32[16,100], index: 0, kind: input, shape index: {}]
  %s1 = inlined_call_operand.hbm [shape: f32[16,100], index: 1, kind: input, shape index: {}]
  %s2 = inlined_call_operand.hbm [shape: f32[1,16], index: 2, kind: output, shape index: {}]
  %s3 = sld [smem:[#allocation0]]
  $region26: #{tpu_custom_call.1} parent=0
    _
  %s5 = ssub.s32 1, %s3
  %s6 = scalar_select 0, %s5, %s3
  $region1: #{tpu_custom_call.1} parent=0
    #allocation2 [shape = 'u8[8192]{0}', space=vmem, size = 0x2000, scoped, tag = 'input window, operand 0, single buffered']
    #allocation3 [shape = 's32[1]{0}', space=sflag, size = 0x4, scoped, tag = 'scoped memory for tpu_custom_call.1']
    #allocation4 [shape = 's32[1]{0}', space=sflag, size = 0x4, scoped, tag = 'scoped memory for tpu_custom_call.1']
    #allocation5 [shape = 'u8[8192]{0}', space=vmem, size = 0x2000, scoped, tag = 'input window, operand 1, single buffered']
    #allocation6 [shape = 's32[1]{0}', space=sflag, size = 0x4, scoped, tag = 'scoped memory for tpu_custom_call.1']
    #allocation7 [shape = 'u8[512]{0}', space=vmem, size = 0x400, scoped, tag = 'output window, operand 0, single buffered']
    %7 = vsyncpa [#allocation3], 0
    %8 = vsyncpa [#allocation6], 0
    %9 = vsyncpa [#allocation4], 0
    // Predicated region
    $region2: #{tpu_custom_call.1} parent=1 // pred_check
      _
    $region3: #{tpu_custom_call.1} parent=1 // pred_check_branch
      %11 = sbr.rel (0) target = $region5
    $region4: #{tpu_custom_call.1} parent=1 // pred_region
      %13 = vsyncadd [#allocation3], 0
      %s14 = sshll.u32 %s0, 4
      %s15 = int_to_ptr.hbm [resolvable:$true] %s14
      %s16 = sshll.u32 [#allocation2], 4
      %s17 = int_to_ptr.vmem [resolvable:$true] %s16
      %22 = dma.hbm_to_vmem [thread:$0]  %s15, 256, %s17, [#allocation3], 128, 128, 8
    $region5: #{tpu_custom_call.1} parent=1 // pred_fallthru
      _
    // Predicated region
    $region6: #{tpu_custom_call.1} parent=1 // pred_check
      _
    $region7: #{tpu_custom_call.1} parent=1 // pred_check_branch
      %24 = sbr.rel (0) target = $region9
    $region8: #{tpu_custom_call.1} parent=1 // pred_region
      %26 = vsyncadd [#allocation6], 0
      %s27 = sshll.u32 %s1, 4
      %s28 = int_to_ptr.hbm [resolvable:$true] %s27
      %s29 = sshll.u32 [#allocation5], 4
      %s30 = int_to_ptr.vmem [resolvable:$true] %s29
      %35 = dma.hbm_to_vmem [thread:$0]  %s28, 256, %s30, [#allocation6], 128, 128, 8
    $region9: #{tpu_custom_call.1} parent=1 // pred_fallthru
      _
    // Predicated region
    $region10: #{tpu_custom_call.1} parent=1 // pred_check
      _
    $region11: #{tpu_custom_call.1} parent=1 // pred_check_branch
      %37 = sbr.rel (0) target = $region13
    $region12: #{tpu_custom_call.1} parent=1 // pred_region
      %39 = dma.done [#allocation3], 256
    $region13: #{tpu_custom_call.1} parent=1 // pred_fallthru
      _
    // Predicated region
    $region14: #{tpu_custom_call.1} parent=1 // pred_check
      _
    $region15: #{tpu_custom_call.1} parent=1 // pred_check_branch
      %41 = sbr.rel (0) target = $region17
    $region16: #{tpu_custom_call.1} parent=1 // pred_region
      %43 = dma.done [#allocation6], 256
    $region17: #{tpu_custom_call.1} parent=1 // pred_fallthru
      _
    %v44 = vld [vmem:[#allocation2] sm:$0xff]
    %v45 = vld [vmem:[#allocation2 + $0x8] sm:$0xff]
    %v46 = vld [vmem:[#allocation5] sm:$0xff]
    %v47 = vld [vmem:[#allocation5 + $0x8] sm:$0xff]
    %vm48 = vcmask 818176
    %v49 = vsel %vm48, %v44, -inf
    %50 = vmax.xlane.f32.xlu0 %v49
    %v51 = vpop.xlane.xlu0 %50
    %v52 = vsel %vm48, %v45, -inf
    %53 = vmax.xlane.f32.xlu0 %v52
    %v54 = vpop.xlane.xlu0 %53
    %v55 = vsub.f32 %v44, %v51
    %v56 = vsub.f32 %v45, %v54
    %v57 = vmul.f32 %v55, 1.442695
    %v58 = vpow.pop %v57
    %v59 = vmul.f32 %v56, 1.442695
    %v60 = vpow.pop %v59
    %v61 = vsel %vm48, %v58, 0.0
    %62 = vadd.xlane.f32.xlu0 %v61
    %v63 = vpop.xlane.xlu0 %62
    %v64 = vsel %vm48, %v60, 0.0
    %65 = vadd.xlane.f32.xlu0 %v64
    %v66 = vpop.xlane.xlu0 %65
    %v67 = vlog2.pop %v63
    %v68 = vmul.f32 %v67, 0.6931472
    %v69 = vlog2.pop %v66
    %v70 = vmul.f32 %v69, 0.6931472
    %v71 = vadd.f32 %v51, %v68
    %v72 = vadd.f32 %v54, %v70
    %v73 = vmul.f32 %v44, %v46
    %v74 = vmul.f32 %v45, %v47
    %v75 = vsel %vm48, %v73, 0.0
    %76 = vadd.xlane.f32.xlu0 %v75
    %v77 = vpop.xlane.xlu0 %76
    %v78 = vsel %vm48, %v74, 0.0
    %79 = vadd.xlane.f32.xlu0 %v78
    %v80 = vpop.xlane.xlu0 %79
    %v81 = vsel %vm48, %v46, 0.0
    %82 = vadd.xlane.f32.xlu0 %v81
    %v83 = vpop.xlane.xlu0 %82
    %v84 = vsel %vm48, %v47, 0.0
    %85 = vadd.xlane.f32.xlu0 %v84
    %v86 = vpop.xlane.xlu0 %85
    %v87 = vmul.f32 %v71, %v83
    %v88 = vmul.f32 %v72, %v86
    %v89 = vsub.f32 %v87, %v77
    %v90 = vsub.f32 %v88, %v80
    %v93 = vlaneseq
    %v94 = vand.u32 %v93, 127
    %v95 = vperm.slane %v89, %v94
    %v96 = vadd.s32 %v94, 4294967288
    %v97 = vperm.slane %v90, %v96
    %vm98 = vcmask 130112
    %v99 = vsel %vm98, %v97, %v95
    %vm101 = vcmask 122880
    %102 = vst.msk [vmem:[#allocation7] sm:$0x1] %vm101, %v99
    // Predicated region
    $region18: #{tpu_custom_call.1} parent=1 // pred_check
      _
    $region19: #{tpu_custom_call.1} parent=1 // pred_check_branch
      %104 = sbr.rel (0) target = $region21
    $region20: #{tpu_custom_call.1} parent=1 // pred_region
      %106 = vsyncadd [#allocation4], 0
      %s108 = sshll.u32 [#allocation7], 4
      %s109 = int_to_ptr.vmem [resolvable:$true] %s108
      %s110 = sshll.u32 %s2, 4
      %s111 = int_to_ptr.hbm [resolvable:$true] %s110
      %113 = dma.vmem_to_hbm [thread:$0]  %s109, 16, %s111, [#allocation4]
    $region21: #{tpu_custom_call.1} parent=1 // pred_fallthru
      _
    // Predicated region
    $region22: #{tpu_custom_call.1} parent=1 // pred_check
      _
    $region23: #{tpu_custom_call.1} parent=1 // pred_check_branch
      %115 = sbr.rel (0) target = $region25
    $region24: #{tpu_custom_call.1} parent=1 // pred_region
      %117 = dma.done [#allocation4], 16
    $region25: #{tpu_custom_call.1} parent=1 // pred_fallthru
      _
    %118 = vsyncpa [#allocation3], 1
    %119 = vsyncpa [#allocation6], 1
    %120 = vsyncpa [#allocation4], 1

// kernel: tpu_custom_call.1
$region0: #{tpu_custom_call.1}
  #allocation0 [shape = 'u32[]', space=smem, size = 0x4, offset = 0x4, fixed_abs, tag = 'smem constant byte address 0x4 - core index']
  #allocation1 [shape = 'u32[72,128]{1,0:T(1,128)}', space=vmem, size = 0x9000, scoped, tag = 'internal scratch']
  %s0 = inlined_call_operand.hbm [shape: f32[16,100], index: 0, kind: input, shape index: {}]
  %s1 = inlined_call_operand.hbm [shape: f32[16,100], index: 1, kind: input, shape index: {}]
  %s2 = inlined_call_operand.vmem [shape: f32[16,1], index: 2, kind: output, shape index: {}]
  %s3 = sld [smem:[#allocation0]]
  $region26: #{tpu_custom_call.1} parent=0
    _
  %s5 = ssub.s32 1, %s3
  %s6 = scalar_select 0, %s5, %s3
  $region1: #{tpu_custom_call.1} parent=0
    #allocation2 [shape = 'u8[8192]{0}', space=vmem, size = 0x2000, scoped, tag = 'input window, operand 0, single buffered']
    #allocation3 [shape = 's32[1]{0}', space=sflag, size = 0x4, scoped, tag = 'scoped memory for tpu_custom_call.1']
    #allocation4 [shape = 'u8[8192]{0}', space=vmem, size = 0x2000, scoped, tag = 'input window, operand 1, single buffered']
    #allocation5 [shape = 's32[1]{0}', space=sflag, size = 0x4, scoped, tag = 'scoped memory for tpu_custom_call.1']
    %7 = vsyncpa [#allocation3], 0
    %8 = vsyncpa [#allocation5], 0
    // Predicated region
    $region2: #{tpu_custom_call.1} parent=1 // pred_check
      _
    $region3: #{tpu_custom_call.1} parent=1 // pred_check_branch
      %10 = sbr.rel (0) target = $region5
    $region4: #{tpu_custom_call.1} parent=1 // pred_region
      %12 = vsyncadd [#allocation3], 0
      %s13 = sshll.u32 %s0, 4
      %s14 = int_to_ptr.hbm [resolvable:$true] %s13
      %s15 = sshll.u32 [#allocation2], 4
      %s16 = int_to_ptr.vmem [resolvable:$true] %s15
      %21 = dma.hbm_to_vmem [thread:$0]  %s14, 256, %s16, [#allocation3], 128, 128, 8
    $region5: #{tpu_custom_call.1} parent=1 // pred_fallthru
      _
    // Predicated region
    $region6: #{tpu_custom_call.1} parent=1 // pred_check
      _
    $region7: #{tpu_custom_call.1} parent=1 // pred_check_branch
      %23 = sbr.rel (0) target = $region9
    $region8: #{tpu_custom_call.1} parent=1 // pred_region
      %25 = vsyncadd [#allocation5], 0
      %s26 = sshll.u32 %s1, 4
      %s27 = int_to_ptr.hbm [resolvable:$true] %s26
      %s28 = sshll.u32 [#allocation4], 4
      %s29 = int_to_ptr.vmem [resolvable:$true] %s28
      %34 = dma.hbm_to_vmem [thread:$0]  %s27, 256, %s29, [#allocation5], 128, 128, 8
    $region9: #{tpu_custom_call.1} parent=1 // pred_fallthru
      _
    // Predicated region
    $region10: #{tpu_custom_call.1} parent=1 // pred_check
      _
    $region11: #{tpu_custom_call.1} parent=1 // pred_check_branch
      %36 = sbr.rel (0) target = $region13
    $region12: #{tpu_custom_call.1} parent=1 // pred_region
      %38 = dma.done [#allocation3], 256
    $region13: #{tpu_custom_call.1} parent=1 // pred_fallthru
      _
    // Predicated region
    $region14: #{tpu_custom_call.1} parent=1 // pred_check
      _
    $region15: #{tpu_custom_call.1} parent=1 // pred_check_branch
      %40 = sbr.rel (0) target = $region17
    $region16: #{tpu_custom_call.1} parent=1 // pred_region
      %42 = dma.done [#allocation5], 256
    $region17: #{tpu_custom_call.1} parent=1 // pred_fallthru
      _
    %v43 = vld [vmem:[#allocation2] sm:$0xff]
    %v44 = vld [vmem:[#allocation2 + $0x8] sm:$0xff]
    %v45 = vld [vmem:[#allocation4] sm:$0xff]
    %v46 = vld [vmem:[#allocation4 + $0x8] sm:$0xff]
    %vm47 = vcmask 818176
    %v48 = vsel %vm47, %v43, -inf
    %49 = vmax.xlane.f32.xlu0 %v48
    %v50 = vpop.xlane.xlu0 %49
    %v51 = vsel %vm47, %v44, -inf
    %52 = vmax.xlane.f32.xlu0 %v51
    %v53 = vpop.xlane.xlu0 %52
    %v54 = vsub.f32 %v43, %v50
    %v55 = vsub.f32 %v44, %v53
    %v56 = vmul.f32 %v54, 1.442695
    %v57 = vpow.pop %v56
    %v58 = vmul.f32 %v55, 1.442695
    %v59 = vpow.pop %v58
    %v60 = vsel %vm47, %v57, 0.0
    %61 = vadd.xlane.f32.xlu0 %v60
    %v62 = vpop.xlane.xlu0 %61
    %v63 = vsel %vm47, %v59, 0.0
    %64 = vadd.xlane.f32.xlu0 %v63
    %v65 = vpop.xlane.xlu0 %64
    %v66 = vlog2.pop %v62
    %v67 = vmul.f32 %v66, 0.6931472
    %v68 = vlog2.pop %v65
    %v69 = vmul.f32 %v68, 0.6931472
    %v70 = vadd.f32 %v50, %v67
    %v71 = vadd.f32 %v53, %v69
    %v72 = vmul.f32 %v43, %v45
    %v73 = vmul.f32 %v44, %v46
    %v74 = vsel %vm47, %v72, 0.0
    %75 = vadd.xlane.f32.xlu0 %v74
    %v76 = vpop.xlane.xlu0 %75
    %v77 = vsel %vm47, %v73, 0.0
    %78 = vadd.xlane.f32.xlu0 %v77
    %v79 = vpop.xlane.xlu0 %78
    %v80 = vsel %vm47, %v45, 0.0
    %81 = vadd.xlane.f32.xlu0 %v80
    %v82 = vpop.xlane.xlu0 %81
    %v83 = vsel %vm47, %v46, 0.0
    %84 = vadd.xlane.f32.xlu0 %v83
    %v85 = vpop.xlane.xlu0 %84
    %v86 = vmul.f32 %v70, %v82
    %v87 = vmul.f32 %v71, %v85
    %v88 = vsub.f32 %v86, %v76
    %v89 = vsub.f32 %v87, %v79
    %vm90 = vcmask 7168
    %91 = vst.msk [vmem:[%s2] sm:$0xff] %vm90, %v88
    %92 = vst.msk [vmem:[%s2 + $0x8] sm:$0xff] %vm90, %v89
    // Predicated region
    $region18: #{tpu_custom_call.1} parent=1 // pred_check
      _
    $region19: #{tpu_custom_call.1} parent=1 // pred_check_branch
      %94 = sbr.rel (0) target = $region21
    $region20: #{tpu_custom_call.1} parent=1 // pred_region
      _
    $region21: #{tpu_custom_call.1} parent=1 // pred_fallthru
      _
    // Predicated region
    $region22: #{tpu_custom_call.1} parent=1 // pred_check
      _
    $region23: #{tpu_custom_call.1} parent=1 // pred_check_branch
      %96 = sbr.rel (0) target = $region25
    $region24: #{tpu_custom_call.1} parent=1 // pred_region
      _
    $region25: #{tpu_custom_call.1} parent=1 // pred_fallthru
      _
    %97 = vsyncpa [#allocation3], 1
    %98 = vsyncpa [#allocation5], 1

</llo_original>
